<compile_context>
chip_gen: v7x
topology: tpu7x:2x2x1
jax: 0.10.0
libtpu: 0.0.40
codegen_flags: <defaults>
</compile_context>

<pallas_src>
import jax
import jax.numpy as jnp
from jax.experimental import pallas as pl
from jax.experimental.pallas import tpu as pltpu

# Packed-parameter slab (rows x lanes), f32, shape (48, 16):
#   rows  0:16 ("seg1"): W1 (10,2) in cols 0:2 | b1 in col 2 | w4 in col 3 | b4 at [0,4]
#   rows 16:32 ("seg2"): W2 (10,10) in cols 0:10 | b2 in col 10
#   rows 32:48 ("seg3"): W3 (10,10) in cols 0:10 | b3 in col 10
# Weights are PyTorch (out, in) layout. Unused entries are zero, so the padded
# activation rows (10:16) stay exactly zero through every layer.
P_ROWS, P_COLS = 48, 16
HID = 10          # true hidden width
NPAD = 16         # hidden width padded to two f32 sublane tiles


def xor_mlp_kernel(x_ref, p_ref, o_ref):
    xt = x_ref[...]                          # (2, TB)  features x batch(lanes)

    seg1 = p_ref[0:16, :]                    # tile-aligned 16-row loads: no repack
    seg2 = p_ref[16:32, :]
    seg3 = p_ref[32:48, :]

    # ---- layer1 + ReLU  (K=2, unrolled on the VPU) -------------------------
    h = seg1[:, 2:3] \
        + seg1[:, 0:1] * xt[0:1, :] \
        + seg1[:, 1:2] * xt[1:2, :]          # (NPAD, TB)
    h = jnp.maximum(h, 0.0)

    # ---- layer2 + ReLU  (10x10 as 10 VPU broadcast mul-adds, no MXU) -------
    acc = seg2[:, HID:HID + 1]               # b2 column (NPAD, 1)
    for k in range(HID):
        acc = acc + seg2[:, k:k + 1] * h[k:k + 1, :]
    h = jnp.maximum(acc, 0.0)

    # ---- layer3 + ReLU ------------------------------------------------------
    acc = seg3[:, HID:HID + 1]               # b3 column
    for k in range(HID):
        acc = acc + seg3[:, k:k + 1] * h[k:k + 1, :]
    h = jnp.maximum(acc, 0.0)

    # ---- layer4 (N=1): column-weighted sublane reduce (XLU), lane-dense out -
    w4c = seg1[:, 3:4]                       # (NPAD, 1), zero in padded rows
    b4 = seg1[0:1, 4:5]                      # (1, 1)
    out = jnp.sum(w4c * h, axis=0, keepdims=True) + b4     # (1, TB)
    o_ref[...] = out.astype(o_ref.dtype)


def xor_model_forward(x, packed_params, *, tb=None):
    """x: (B, 2) f32, packed_params: (48, 16) slab from pack_params(). -> (B, 1)."""
    B = x.shape[0]
    if tb is None:
        tb = 512 if B >= 512 else 128        # >=512 lanes once B justifies it
    B_pad = ((B + tb - 1) // tb) * tb

    xt = jnp.asarray(x, jnp.float32).T       # (2, B): batch on the lane axis
    if B_pad != B:
        xt = jnp.pad(xt, ((0, 0), (0, B_pad - B)))

    flops = 2 * (2 * HID + HID * HID + HID * HID + HID) * B_pad
    bytes_acc = (2 + 1) * 4 * B_pad + P_ROWS * P_COLS * 4

    out_t = pl.pallas_call(
        xor_mlp_kernel,
        out_shape=jax.ShapeDtypeStruct((1, B_pad), jnp.float32),
        grid_spec=pltpu.PrefetchScalarGridSpec(
            num_scalar_prefetch=0,
            grid=(B_pad // tb,),
            in_specs=[
                pl.BlockSpec((2, tb), lambda i: (0, i)),            # x block
                pl.BlockSpec((P_ROWS, P_COLS), lambda i: (0, 0)),   # resident params
            ],
            out_specs=pl.BlockSpec((1, tb), lambda i: (0, i)),
        ),
        compiler_params=pltpu.CompilerParams(
            dimension_semantics=("parallel",)),
        cost_estimate=pl.CostEstimate(
            flops=flops, transcendentals=0, bytes_accessed=bytes_acc),
    )(xt, packed_params)

    return out_t[:, :B].T                    # (B, 1)


def init_params(key):
    """PyTorch nn.Linear-style init: U(-1/sqrt(fan_in), 1/sqrt(fan_in)) for
    weight and bias; weights stored (out_features, in_features)."""
    dims = [(2, 10), (10, 10), (10, 10), (10, 1)]
    params = {}
    for idx, (fan_in, fan_out) in enumerate(dims, start=1):
        key, kw, kb = jax.random.split(key, 3)
        bound = 1.0 / jnp.sqrt(float(fan_in))
        params[f"w{idx}"] = jax.random.uniform(
            kw, (fan_out, fan_in), jnp.float32, -bound, bound)
        params[f"b{idx}"] = jax.random.uniform(
            kb, (fan_out,), jnp.float32, -bound, bound)
    return params


def pack_params(params):
    """Pack all weights/biases into one (48, 16) f32 slab (see layout above)."""
    slab = jnp.zeros((P_ROWS, P_COLS), jnp.float32)
    slab = slab.at[0:HID, 0:2].set(params["w1"])            # W1 (10, 2)
    slab = slab.at[0:HID, 2].set(params["b1"])              # b1 (10,)
    slab = slab.at[0:HID, 3].set(params["w4"][0, :])        # w4 (1,10) as column
    slab = slab.at[0, 4].set(params["b4"][0])               # b4 scalar
    slab = slab.at[16:16 + HID, 0:HID].set(params["w2"])    # W2 (10, 10)
    slab = slab.at[16:16 + HID, HID].set(params["b2"])      # b2 (10,)
    slab = slab.at[32:32 + HID, 0:HID].set(params["w3"])    # W3 (10, 10)
    slab = slab.at[32:32 + HID, HID].set(params["b3"])      # b3 (10,)
    return slab


def reference_forward(x, params):
    h = jnp.maximum(x @ params["w1"].T + params["b1"], 0.0)
    h = jnp.maximum(h @ params["w2"].T + params["b2"], 0.0)
    h = jnp.maximum(h @ params["w3"].T + params["b3"], 0.0)
    return h @ params["w4"].T + params["b4"]


if __name__ == "__main__":
    key = jax.random.PRNGKey(0)
    params = init_params(key)
    packed = pack_params(params)

    key, kx = jax.random.split(key)
    B = 256                                  # 2 grid steps of 128 lanes each
    x = jax.random.uniform(kx, (B, 2), jnp.float32)

    out = jax.block_until_ready(xor_model_forward(x, packed))

    ref = reference_forward(x, params)
    assert out.shape == (B, 1), out.shape
    assert jnp.allclose(out, ref, atol=1e-5, rtol=1e-5), (out, ref)

    print("KERNEL_OK")
</pallas_src>

<mosaic_0001>
module attributes {stable_mosaic.version = 11 : i64} {
  func.func @xor_mlp_kernel(%arg0: i32, %arg1: memref<2x128xf32, #tpu.memory_space<vmem>>, %arg2: memref<48x16xf32, #tpu.memory_space<vmem>>, %arg3: memref<1x128xf32, #tpu.memory_space<vmem>>) attributes {dimension_semantics = [#tpu.dimension_semantics<parallel>], iteration_bounds = array<i64: 2>, scalar_prefetch = 0 : i64, scratch_operands = 0 : i64, tpu.core_type = #tpu.core_type<tc>, window_params = [{transform_indices = @transform_0, window_bounds = array<i64: 2, 128>}, {pipeline_mode = #tpu.pipeline_mode<synchronous>, transform_indices = @transform_1, window_bounds = array<i64: 48, 16>}, {transform_indices = @transform_2, window_bounds = array<i64: 1, 128>}]} {
    %c0 = arith.constant 0 : index
    %c0_0 = arith.constant 0 : index
    %0 = vector.load %arg1[%c0, %c0_0] : memref<2x128xf32, #tpu.memory_space<vmem>>, vector<2x128xf32>
    %c0_1 = arith.constant 0 : index
    %c0_2 = arith.constant 0 : index
    %1 = vector.load %arg2[%c0_1, %c0_2] : memref<48x16xf32, #tpu.memory_space<vmem>>, vector<16x16xf32>
    %c16 = arith.constant 16 : index
    %c0_3 = arith.constant 0 : index
    %2 = vector.load %arg2[%c16, %c0_3] : memref<48x16xf32, #tpu.memory_space<vmem>>, vector<16x16xf32>
    %c32 = arith.constant 32 : index
    %c0_4 = arith.constant 0 : index
    %3 = vector.load %arg2[%c32, %c0_4] : memref<48x16xf32, #tpu.memory_space<vmem>>, vector<16x16xf32>
    %4 = vector.extract_strided_slice %1 {offsets = [0, 2], sizes = [16, 1], strides = [1, 1]} : vector<16x16xf32> to vector<16x1xf32>
    %5 = vector.extract_strided_slice %1 {offsets = [0, 0], sizes = [16, 1], strides = [1, 1]} : vector<16x16xf32> to vector<16x1xf32>
    %6 = vector.extract_strided_slice %0 {offsets = [0, 0], sizes = [1, 128], strides = [1, 1]} : vector<2x128xf32> to vector<1x128xf32>
    %7 = vector.broadcast %5 : vector<16x1xf32> to vector<16x128xf32>
    %8 = vector.broadcast %6 : vector<1x128xf32> to vector<16x128xf32>
    %9 = arith.mulf %7, %8 : vector<16x128xf32>
    %10 = vector.broadcast %4 : vector<16x1xf32> to vector<16x128xf32>
    %11 = arith.addf %10, %9 : vector<16x128xf32>
    %12 = vector.extract_strided_slice %1 {offsets = [0, 1], sizes = [16, 1], strides = [1, 1]} : vector<16x16xf32> to vector<16x1xf32>
    %13 = vector.extract_strided_slice %0 {offsets = [1, 0], sizes = [1, 128], strides = [1, 1]} : vector<2x128xf32> to vector<1x128xf32>
    %14 = vector.broadcast %12 : vector<16x1xf32> to vector<16x128xf32>
    %15 = vector.broadcast %13 : vector<1x128xf32> to vector<16x128xf32>
    %16 = arith.mulf %14, %15 : vector<16x128xf32>
    %17 = arith.addf %11, %16 : vector<16x128xf32>
    %cst = arith.constant 0.000000e+00 : f32
    %18 = vector.broadcast %cst : f32 to vector<16x128xf32>
    %19 = arith.maximumf %17, %18 : vector<16x128xf32>
    %20 = vector.extract_strided_slice %2 {offsets = [0, 10], sizes = [16, 1], strides = [1, 1]} : vector<16x16xf32> to vector<16x1xf32>
    %21 = vector.extract_strided_slice %2 {offsets = [0, 0], sizes = [16, 1], strides = [1, 1]} : vector<16x16xf32> to vector<16x1xf32>
    %22 = vector.extract_strided_slice %19 {offsets = [0, 0], sizes = [1, 128], strides = [1, 1]} : vector<16x128xf32> to vector<1x128xf32>
    %23 = vector.broadcast %21 : vector<16x1xf32> to vector<16x128xf32>
    %24 = vector.broadcast %22 : vector<1x128xf32> to vector<16x128xf32>
    %25 = arith.mulf %23, %24 : vector<16x128xf32>
    %26 = vector.broadcast %20 : vector<16x1xf32> to vector<16x128xf32>
    %27 = arith.addf %26, %25 : vector<16x128xf32>
    %28 = vector.extract_strided_slice %2 {offsets = [0, 1], sizes = [16, 1], strides = [1, 1]} : vector<16x16xf32> to vector<16x1xf32>
    %29 = vector.extract_strided_slice %19 {offsets = [1, 0], sizes = [1, 128], strides = [1, 1]} : vector<16x128xf32> to vector<1x128xf32>
    %30 = vector.broadcast %28 : vector<16x1xf32> to vector<16x128xf32>
    %31 = vector.broadcast %29 : vector<1x128xf32> to vector<16x128xf32>
    %32 = arith.mulf %30, %31 : vector<16x128xf32>
    %33 = arith.addf %27, %32 : vector<16x128xf32>
    %34 = vector.extract_strided_slice %2 {offsets = [0, 2], sizes = [16, 1], strides = [1, 1]} : vector<16x16xf32> to vector<16x1xf32>
    %35 = vector.extract_strided_slice %19 {offsets = [2, 0], sizes = [1, 128], strides = [1, 1]} : vector<16x128xf32> to vector<1x128xf32>
    %36 = vector.broadcast %34 : vector<16x1xf32> to vector<16x128xf32>
    %37 = vector.broadcast %35 : vector<1x128xf32> to vector<16x128xf32>
    %38 = arith.mulf %36, %37 : vector<16x128xf32>
    %39 = arith.addf %33, %38 : vector<16x128xf32>
    %40 = vector.extract_strided_slice %2 {offsets = [0, 3], sizes = [16, 1], strides = [1, 1]} : vector<16x16xf32> to vector<16x1xf32>
    %41 = vector.extract_strided_slice %19 {offsets = [3, 0], sizes = [1, 128], strides = [1, 1]} : vector<16x128xf32> to vector<1x128xf32>
    %42 = vector.broadcast %40 : vector<16x1xf32> to vector<16x128xf32>
    %43 = vector.broadcast %41 : vector<1x128xf32> to vector<16x128xf32>
    %44 = arith.mulf %42, %43 : vector<16x128xf32>
    %45 = arith.addf %39, %44 : vector<16x128xf32>
    %46 = vector.extract_strided_slice %2 {offsets = [0, 4], sizes = [16, 1], strides = [1, 1]} : vector<16x16xf32> to vector<16x1xf32>
    %47 = vector.extract_strided_slice %19 {offsets = [4, 0], sizes = [1, 128], strides = [1, 1]} : vector<16x128xf32> to vector<1x128xf32>
    %48 = vector.broadcast %46 : vector<16x1xf32> to vector<16x128xf32>
    %49 = vector.broadcast %47 : vector<1x128xf32> to vector<16x128xf32>
    %50 = arith.mulf %48, %49 : vector<16x128xf32>
    %51 = arith.addf %45, %50 : vector<16x128xf32>
    %52 = vector.extract_strided_slice %2 {offsets = [0, 5], sizes = [16, 1], strides = [1, 1]} : vector<16x16xf32> to vector<16x1xf32>
    %53 = vector.extract_strided_slice %19 {offsets = [5, 0], sizes = [1, 128], strides = [1, 1]} : vector<16x128xf32> to vector<1x128xf32>
    %54 = vector.broadcast %52 : vector<16x1xf32> to vector<16x128xf32>
    %55 = vector.broadcast %53 : vector<1x128xf32> to vector<16x128xf32>
    %56 = arith.mulf %54, %55 : vector<16x128xf32>
    %57 = arith.addf %51, %56 : vector<16x128xf32>
    %58 = vector.extract_strided_slice %2 {offsets = [0, 6], sizes = [16, 1], strides = [1, 1]} : vector<16x16xf32> to vector<16x1xf32>
    %59 = vector.extract_strided_slice %19 {offsets = [6, 0], sizes = [1, 128], strides = [1, 1]} : vector<16x128xf32> to vector<1x128xf32>
    %60 = vector.broadcast %58 : vector<16x1xf32> to vector<16x128xf32>
    %61 = vector.broadcast %59 : vector<1x128xf32> to vector<16x128xf32>
    %62 = arith.mulf %60, %61 : vector<16x128xf32>
    %63 = arith.addf %57, %62 : vector<16x128xf32>
    %64 = vector.extract_strided_slice %2 {offsets = [0, 7], sizes = [16, 1], strides = [1, 1]} : vector<16x16xf32> to vector<16x1xf32>
    %65 = vector.extract_strided_slice %19 {offsets = [7, 0], sizes = [1, 128], strides = [1, 1]} : vector<16x128xf32> to vector<1x128xf32>
    %66 = vector.broadcast %64 : vector<16x1xf32> to vector<16x128xf32>
    %67 = vector.broadcast %65 : vector<1x128xf32> to vector<16x128xf32>
    %68 = arith.mulf %66, %67 : vector<16x128xf32>
    %69 = arith.addf %63, %68 : vector<16x128xf32>
    %70 = vector.extract_strided_slice %2 {offsets = [0, 8], sizes = [16, 1], strides = [1, 1]} : vector<16x16xf32> to vector<16x1xf32>
    %71 = vector.extract_strided_slice %19 {offsets = [8, 0], sizes = [1, 128], strides = [1, 1]} : vector<16x128xf32> to vector<1x128xf32>
    %72 = vector.broadcast %70 : vector<16x1xf32> to vector<16x128xf32>
    %73 = vector.broadcast %71 : vector<1x128xf32> to vector<16x128xf32>
    %74 = arith.mulf %72, %73 : vector<16x128xf32>
    %75 = arith.addf %69, %74 : vector<16x128xf32>
    %76 = vector.extract_strided_slice %2 {offsets = [0, 9], sizes = [16, 1], strides = [1, 1]} : vector<16x16xf32> to vector<16x1xf32>
    %77 = vector.extract_strided_slice %19 {offsets = [9, 0], sizes = [1, 128], strides = [1, 1]} : vector<16x128xf32> to vector<1x128xf32>
    %78 = vector.broadcast %76 : vector<16x1xf32> to vector<16x128xf32>
    %79 = vector.broadcast %77 : vector<1x128xf32> to vector<16x128xf32>
    %80 = arith.mulf %78, %79 : vector<16x128xf32>
    %81 = arith.addf %75, %80 : vector<16x128xf32>
    %cst_5 = arith.constant 0.000000e+00 : f32
    %82 = vector.broadcast %cst_5 : f32 to vector<16x128xf32>
    %83 = arith.maximumf %81, %82 : vector<16x128xf32>
    %84 = vector.extract_strided_slice %3 {offsets = [0, 10], sizes = [16, 1], strides = [1, 1]} : vector<16x16xf32> to vector<16x1xf32>
    %85 = vector.extract_strided_slice %3 {offsets = [0, 0], sizes = [16, 1], strides = [1, 1]} : vector<16x16xf32> to vector<16x1xf32>
    %86 = vector.extract_strided_slice %83 {offsets = [0, 0], sizes = [1, 128], strides = [1, 1]} : vector<16x128xf32> to vector<1x128xf32>
    %87 = vector.broadcast %85 : vector<16x1xf32> to vector<16x128xf32>
    %88 = vector.broadcast %86 : vector<1x128xf32> to vector<16x128xf32>
    %89 = arith.mulf %87, %88 : vector<16x128xf32>
    %90 = vector.broadcast %84 : vector<16x1xf32> to vector<16x128xf32>
    %91 = arith.addf %90, %89 : vector<16x128xf32>
    %92 = vector.extract_strided_slice %3 {offsets = [0, 1], sizes = [16, 1], strides = [1, 1]} : vector<16x16xf32> to vector<16x1xf32>
    %93 = vector.extract_strided_slice %83 {offsets = [1, 0], sizes = [1, 128], strides = [1, 1]} : vector<16x128xf32> to vector<1x128xf32>
    %94 = vector.broadcast %92 : vector<16x1xf32> to vector<16x128xf32>
    %95 = vector.broadcast %93 : vector<1x128xf32> to vector<16x128xf32>
    %96 = arith.mulf %94, %95 : vector<16x128xf32>
    %97 = arith.addf %91, %96 : vector<16x128xf32>
    %98 = vector.extract_strided_slice %3 {offsets = [0, 2], sizes = [16, 1], strides = [1, 1]} : vector<16x16xf32> to vector<16x1xf32>
    %99 = vector.extract_strided_slice %83 {offsets = [2, 0], sizes = [1, 128], strides = [1, 1]} : vector<16x128xf32> to vector<1x128xf32>
    %100 = vector.broadcast %98 : vector<16x1xf32> to vector<16x128xf32>
    %101 = vector.broadcast %99 : vector<1x128xf32> to vector<16x128xf32>
    %102 = arith.mulf %100, %101 : vector<16x128xf32>
    %103 = arith.addf %97, %102 : vector<16x128xf32>
    %104 = vector.extract_strided_slice %3 {offsets = [0, 3], sizes = [16, 1], strides = [1, 1]} : vector<16x16xf32> to vector<16x1xf32>
    %105 = vector.extract_strided_slice %83 {offsets = [3, 0], sizes = [1, 128], strides = [1, 1]} : vector<16x128xf32> to vector<1x128xf32>
    %106 = vector.broadcast %104 : vector<16x1xf32> to vector<16x128xf32>
    %107 = vector.broadcast %105 : vector<1x128xf32> to vector<16x128xf32>
    %108 = arith.mulf %106, %107 : vector<16x128xf32>
    %109 = arith.addf %103, %108 : vector<16x128xf32>
    %110 = vector.extract_strided_slice %3 {offsets = [0, 4], sizes = [16, 1], strides = [1, 1]} : vector<16x16xf32> to vector<16x1xf32>
    %111 = vector.extract_strided_slice %83 {offsets = [4, 0], sizes = [1, 128], strides = [1, 1]} : vector<16x128xf32> to vector<1x128xf32>
    %112 = vector.broadcast %110 : vector<16x1xf32> to vector<16x128xf32>
    %113 = vector.broadcast %111 : vector<1x128xf32> to vector<16x128xf32>
    %114 = arith.mulf %112, %113 : vector<16x128xf32>
    %115 = arith.addf %109, %114 : vector<16x128xf32>
    %116 = vector.extract_strided_slice %3 {offsets = [0, 5], sizes = [16, 1], strides = [1, 1]} : vector<16x16xf32> to vector<16x1xf32>
    %117 = vector.extract_strided_slice %83 {offsets = [5, 0], sizes = [1, 128], strides = [1, 1]} : vector<16x128xf32> to vector<1x128xf32>
    %118 = vector.broadcast %116 : vector<16x1xf32> to vector<16x128xf32>
    %119 = vector.broadcast %117 : vector<1x128xf32> to vector<16x128xf32>
    %120 = arith.mulf %118, %119 : vector<16x128xf32>
    %121 = arith.addf %115, %120 : vector<16x128xf32>
    %122 = vector.extract_strided_slice %3 {offsets = [0, 6], sizes = [16, 1], strides = [1, 1]} : vector<16x16xf32> to vector<16x1xf32>
    %123 = vector.extract_strided_slice %83 {offsets = [6, 0], sizes = [1, 128], strides = [1, 1]} : vector<16x128xf32> to vector<1x128xf32>
    %124 = vector.broadcast %122 : vector<16x1xf32> to vector<16x128xf32>
    %125 = vector.broadcast %123 : vector<1x128xf32> to vector<16x128xf32>
    %126 = arith.mulf %124, %125 : vector<16x128xf32>
    %127 = arith.addf %121, %126 : vector<16x128xf32>
    %128 = vector.extract_strided_slice %3 {offsets = [0, 7], sizes = [16, 1], strides = [1, 1]} : vector<16x16xf32> to vector<16x1xf32>
    %129 = vector.extract_strided_slice %83 {offsets = [7, 0], sizes = [1, 128], strides = [1, 1]} : vector<16x128xf32> to vector<1x128xf32>
    %130 = vector.broadcast %128 : vector<16x1xf32> to vector<16x128xf32>
    %131 = vector.broadcast %129 : vector<1x128xf32> to vector<16x128xf32>
    %132 = arith.mulf %130, %131 : vector<16x128xf32>
    %133 = arith.addf %127, %132 : vector<16x128xf32>
    %134 = vector.extract_strided_slice %3 {offsets = [0, 8], sizes = [16, 1], strides = [1, 1]} : vector<16x16xf32> to vector<16x1xf32>
    %135 = vector.extract_strided_slice %83 {offsets = [8, 0], sizes = [1, 128], strides = [1, 1]} : vector<16x128xf32> to vector<1x128xf32>
    %136 = vector.broadcast %134 : vector<16x1xf32> to vector<16x128xf32>
    %137 = vector.broadcast %135 : vector<1x128xf32> to vector<16x128xf32>
    %138 = arith.mulf %136, %137 : vector<16x128xf32>
    %139 = arith.addf %133, %138 : vector<16x128xf32>
    %140 = vector.extract_strided_slice %3 {offsets = [0, 9], sizes = [16, 1], strides = [1, 1]} : vector<16x16xf32> to vector<16x1xf32>
    %141 = vector.extract_strided_slice %83 {offsets = [9, 0], sizes = [1, 128], strides = [1, 1]} : vector<16x128xf32> to vector<1x128xf32>
    %142 = vector.broadcast %140 : vector<16x1xf32> to vector<16x128xf32>
    %143 = vector.broadcast %141 : vector<1x128xf32> to vector<16x128xf32>
    %144 = arith.mulf %142, %143 : vector<16x128xf32>
    %145 = arith.addf %139, %144 : vector<16x128xf32>
    %cst_6 = arith.constant 0.000000e+00 : f32
    %146 = vector.broadcast %cst_6 : f32 to vector<16x128xf32>
    %147 = arith.maximumf %145, %146 : vector<16x128xf32>
    %148 = vector.extract_strided_slice %1 {offsets = [0, 3], sizes = [16, 1], strides = [1, 1]} : vector<16x16xf32> to vector<16x1xf32>
    %149 = vector.extract_strided_slice %1 {offsets = [0, 4], sizes = [1, 1], strides = [1, 1]} : vector<16x16xf32> to vector<1x1xf32>
    %150 = vector.broadcast %148 : vector<16x1xf32> to vector<16x128xf32>
    %151 = arith.mulf %150, %147 : vector<16x128xf32>
    %cst_7 = arith.constant dense<0.000000e+00> : vector<128xf32>
    %152 = vector.multi_reduction <add>, %151, %cst_7 [0] : vector<16x128xf32> to vector<128xf32>
    %153 = vector.shape_cast %152 : vector<128xf32> to vector<1x128xf32>
    %154 = vector.broadcast %149 : vector<1x1xf32> to vector<1x128xf32>
    %155 = arith.addf %153, %154 : vector<1x128xf32>
    %c0_8 = arith.constant 0 : index
    %c0_9 = arith.constant 0 : index
    %156 = vector.load %arg3[%c0_8, %c0_9] : memref<1x128xf32, #tpu.memory_space<vmem>>, vector<1x128xf32>
    tpu.vector_store %arg3[%c0_8, %c0_9], %155 {strides = array<i32>} : memref<1x128xf32, #tpu.memory_space<vmem>>, vector<1x128xf32>,
    return
  }
  func.func @transform_0(%arg0: i32) -> (i32, i32) {
    %c0_i32 = arith.constant 0 : i32
    %c0_i32_0 = arith.constant 0 : i32
    return %c0_i32, %arg0 : i32, i32
  }
  func.func @transform_1(%arg0: i32) -> (i32, i32) {
    %c0_i32 = arith.constant 0 : i32
    %c0_i32_0 = arith.constant 0 : i32
    %c0_i32_1 = arith.constant 0 : i32
    return %c0_i32, %c0_i32_0 : i32, i32
  }
  func.func @transform_2(%arg0: i32) -> (i32, i32) {
    %c0_i32 = arith.constant 0 : i32
    %c0_i32_0 = arith.constant 0 : i32
    return %c0_i32, %arg0 : i32, i32
  }
}

</mosaic_0001>

<llo_original>
// kernel: tpu_custom_call.1
$region0: #{tpu_custom_call.1}
  #allocation0 [shape = 'u32[]', space=smem, size = 0x4, offset = 0x4, fixed_abs, tag = 'smem constant byte address 0x4 - core index']
  #allocation1 [shape = 'u32[144,128]{1,0:T(1,128)}', space=vmem, size = 0x12000, scoped, tag = 'internal scratch']
  %s0 = inlined_call_operand.vmem [shape: f32[2,256], index: 0, kind: input, shape index: {}]
  %s1 = inlined_call_operand.vmem [shape: f32[48,16], index: 1, kind: input, shape index: {}]
  %s2 = inlined_call_operand.hbm [shape: f32[1,256], index: 2, kind: output, shape index: {}]
  %s3 = sld [smem:[#allocation0]]
  $region41: #{tpu_custom_call.1} parent=0
    _
  %s5 = ssub.s32 1, %s3
  %s6 = scalar_select 0, %s5, %s3
  $region1: #{tpu_custom_call.1} parent=0
    #allocation2 [shape = 'u8[1024]{0}', space=vmem, size = 0x400, scoped, tag = 'output window, operand 0']
    #allocation3 [shape = 's32[2]{0}', space=sflag, size = 0x8, scoped, tag = 'scoped memory for tpu_custom_call.1']
    %7 = vsyncpa [#allocation3], 0
    %s8 = scalar_lea.sflag [#allocation3], 1
    %9 = vsyncpa %s8, 0
    loop: start=0, step=1, limit=4
    $region2: #{tpu_custom_call.1} parent=1 // loop_pre_header
      _
    $region3: #{tpu_custom_call.1} parent=1 // loop_header
      %s11 = sphi 0, %s15
      %p12 = scmp.ge.s32.totalorder %s11, 4
      %s21 = sphi 0, %s23
      %s24 = sphi 0, %s21
      %s25 = sphi 0, %s24
      %s41 = sphi 0, %s25
      %s45 = sphi 0, %s45
      %s47 = sphi 0, %s45
      %s48 = sphi 0, %s47
      %s62 = sphi 0, %s48
      %s68 = sphi 0, %s70
      %s71 = sphi 0, %s68
      %s72 = sphi 0, %s71
      %s88 = sphi 0, %s72
    $region4: #{tpu_custom_call.1} parent=1 // loop_header_branch
      %14 = sbr.rel (%p12) target = $region8
    $region5: #{tpu_custom_call.1} parent=1 // loop_body
      %s16 = ssub.s32 %s11, 1
      %s17 = ssub.s32 %s11, 2
      %s18 = sadd.s32 %s11, 1
      %s19 = ssub.s32 %s11, %s18
      %p20 = scmp.eq.s32.totalorder %s19, 0
      %s22 = sadd.s32 %s21, 1
      %s23 = scalar_select %p20, %s21, %s22
      %p26 = pneg %p20
      %p27 = scmp.eq.s32.totalorder %s11, 1
      %p28 = por %p26, %p27
      %p29 = scmp.ne.s32.totalorder %s21, %s24
      %p30 = scmp.eq.s32.totalorder %s11, 0
      %p31 = por %p29, %p30
      %p32 = scmp.ne.s32.totalorder %s21, %s24
      %p33 = scmp.eq.s32.totalorder %s16, 1
      %p34 = por %p32, %p33
      %p35 = scmp.ne.s32.totalorder %s24, %s25
      %p36 = scmp.eq.s32.totalorder %s16, 0
      %p37 = por %p35, %p36
      %p38 = scmp.ne.s32.totalorder %s24, %s25
      %p39 = scmp.eq.s32.totalorder %s17, 1
      %p40 = por %p38, %p39
      %p42 = scmp.ne.s32.totalorder %s25, %s41
      %p43 = scmp.eq.s32.totalorder %s17, 0
      %p44 = por %p42, %p43
      %s46 = sadd.s32 %s45, 1
      %p49 = scmp.eq.s32.totalorder %s11, 1
      %p50 = scmp.ne.s32.totalorder %s45, %s47
      %p51 = scmp.eq.s32.totalorder %s11, 0
      %p52 = por %p50, %p51
      %p53 = scmp.ne.s32.totalorder %s45, %s47
      %p54 = scmp.eq.s32.totalorder %s16, 1
      %p55 = por %p53, %p54
      %p56 = scmp.ne.s32.totalorder %s47, %s48
      %p57 = scmp.eq.s32.totalorder %s16, 0
      %p58 = por %p56, %p57
      %p59 = scmp.ne.s32.totalorder %s47, %s48
      %p60 = scmp.eq.s32.totalorder %s17, 1
      %p61 = por %p59, %p60
      %p63 = scmp.ne.s32.totalorder %s48, %s62
      %p64 = scmp.eq.s32.totalorder %s17, 0
      %p65 = por %p63, %p64
      %s66 = ssub.s32 %s11, %s18
      %p67 = scmp.eq.s32.totalorder %s66, 0
      %s69 = sadd.s32 %s68, 1
      %s70 = scalar_select %p67, %s68, %s69
      %p73 = pneg %p67
      %p74 = scmp.eq.s32.totalorder %s11, 1
      %p75 = por %p73, %p74
      %p76 = scmp.ne.s32.totalorder %s68, %s71
      %p77 = scmp.eq.s32.totalorder %s11, 0
      %p78 = por %p76, %p77
      %p79 = scmp.ne.s32.totalorder %s68, %s71
      %p80 = scmp.eq.s32.totalorder %s16, 1
      %p81 = por %p79, %p80
      %p82 = scmp.ne.s32.totalorder %s71, %s72
      %p83 = scmp.eq.s32.totalorder %s16, 0
      %p84 = por %p82, %p83
      %p85 = scmp.ne.s32.totalorder %s71, %s72
      %p86 = scmp.eq.s32.totalorder %s17, 1
      %p87 = por %p85, %p86
      %p89 = scmp.ne.s32.totalorder %s72, %s88
      %p90 = scmp.eq.s32.totalorder %s17, 0
      %p91 = por %p89, %p90
      %p92 = scmp.le.s32.totalorder 1, %s11
      %p93 = scmp.lt.s32.totalorder %s11, 3
      %p94 = pnand %p92, %p93
      %p95 = pneg %p94
      // Predicated region
      $region9: #{tpu_custom_call.1} parent=5 // pred_check
        _
      $region10: #{tpu_custom_call.1} parent=5 // pred_check_branch
        %97 = sbr.rel (%p94) target = $region12
      $region11: #{tpu_custom_call.1} parent=5 // pred_region
        %s98 = ssub.s32 %s11, 1
        // Predicated region
        $region13: #{tpu_custom_call.1} parent=11 // pred_check
          %p99 = pneg %p58
        $region14: #{tpu_custom_call.1} parent=11 // pred_check_branch
          %101 = sbr.rel (%p99) target = $region16
        $region15: #{tpu_custom_call.1} parent=11 // pred_region
          _
        $region16: #{tpu_custom_call.1} parent=11 // pred_fallthru
          _
      $region12: #{tpu_custom_call.1} parent=5 // pred_fallthru
        _
      %p102 = scmp.lt.s32.totalorder %s11, 2
      // Predicated region
      $region17: #{tpu_custom_call.1} parent=5 // pred_check
        %p103 = pneg %p102
      $region18: #{tpu_custom_call.1} parent=5 // pred_check_branch
        %105 = sbr.rel (%p103) target = $region20
      $region19: #{tpu_custom_call.1} parent=5 // pred_region
        // Predicated region
        $region21: #{tpu_custom_call.1} parent=19 // pred_check
          %p106 = pneg %p31
        $region22: #{tpu_custom_call.1} parent=19 // pred_check_branch
          %108 = sbr.rel (%p106) target = $region24
        $region23: #{tpu_custom_call.1} parent=19 // pred_region
          %p109 = scmp.lt.s32.totalorder %s11, 1
          %s110 = scalar_select %p109, %s11, 1
          %s111 = smul.addr %s110, 2
          %s112 = scalar_lea.vmem %s0, %s111
        $region24: #{tpu_custom_call.1} parent=19 // pred_fallthru
          _
      $region20: #{tpu_custom_call.1} parent=5 // pred_fallthru
        _
      %p113 = scmp.le.s32.totalorder 1, %s11
      %p114 = scmp.lt.s32.totalorder %s11, 3
      %p115 = pnand %p113, %p114
      %p116 = pneg %p115
      // Predicated region
      $region25: #{tpu_custom_call.1} parent=5 // pred_check
        _
      $region26: #{tpu_custom_call.1} parent=5 // pred_check_branch
        %118 = sbr.rel (%p115) target = $region28
      $region27: #{tpu_custom_call.1} parent=5 // pred_region
        %s119 = ssub.s32 %s11, 1
        %p120 = scmp.lt.s32.totalorder %s16, 1
        %s121 = scalar_select %p120, %s16, 1
        %s122 = smul.addr %s121, 2
        %s123 = scalar_lea.vmem %s0, %s122
        %p124 = pneg %p37
        %p125 = pneg %p34
        %p126 = pneg %p58
        %p127 = pneg %p55
        %p128 = pneg %p84
        %p129 = pneg %p81
        %s130 = sand.u32 %s71, 1
        %s131 = scalar_lea.sflag [#allocation3], %s130
        %s132 = sand.u32 %s71, 1
        %s133 = scalar_lea.vmem [#allocation2], %s132
        %p134 = scmp.lt.s32.totalorder %s16, 1
        %s135 = scalar_select %p134, %s16, 1
        %s136 = smul.addr %s135, 2
        %s137 = scalar_lea.vmem %s0, %s136
        %v138 = vld [vmem:[%s137] sm:$0x3]
        %v139 = vld [vmem:[%s1] sm:$0xff]
        %v140 = vld [vmem:[%s1 + $0x8] sm:$0xff]
        %v141 = vld [vmem:[%s1 + $0x10] sm:$0xff]
        %v142 = vld [vmem:[%s1 + $0x18] sm:$0xff]
        %v143 = vld [vmem:[%s1 + $0x20] sm:$0xff]
        %v144 = vld [vmem:[%s1 + $0x28] sm:$0xff]
        %146 = vset.pattern.permute.xlu0 0
        %147 = vperm.xlu0 %146, %v139
        %v148 = vpop.permute.xlu0 %147
        %151 = vset.pattern.permute.xlu0 0
        %152 = vperm.xlu0 %151, %v140
        %v153 = vpop.permute.xlu0 %152
        %v155 = vlaneseq
        %v156 = vshrl.u32 %v155, 7
        %v157 = vsub.s32 0, %v156
        %v158 = vrot.slane %v138, %v157
        %v159 = vmul.f32 %v148, %v158
        %v160 = vmul.f32 %v153, %v158
        %161 = vset.pattern.permute.xlu0 2
        %162 = vperm.xlu0 %161, %v139
        %v163 = vpop.permute.xlu0 %162
        %165 = vset.pattern.permute.xlu0 2
        %166 = vperm.xlu0 %165, %v140
        %v167 = vpop.permute.xlu0 %166
        %v169 = vadd.f32 %v163, %v159
        %v170 = vadd.f32 %v167, %v160
        %171 = vset.pattern.permute.xlu0 1
        %172 = vperm.xlu0 %171, %v139
        %v173 = vpop.permute.xlu0 %172
        %175 = vset.pattern.permute.xlu0 1
        %176 = vperm.xlu0 %175, %v140
        %v177 = vpop.permute.xlu0 %176
        %v179 = vlaneseq
        %v180 = vshrl.u32 %v179, 7
        %v181 = vsub.s32 1, %v180
        %v182 = vrot.slane %v138, %v181
        %v183 = vmul.f32 %v173, %v182
        %v184 = vmul.f32 %v177, %v182
        %v185 = vadd.f32 %v169, %v183
        %v186 = vadd.f32 %v170, %v184
        %v187 = vmax.f32 %v185, 0.0
        %v188 = vmax.f32 %v186, 0.0
        %190 = vset.pattern.permute.xlu0 0
        %191 = vperm.xlu0 %190, %v141
        %v192 = vpop.permute.xlu0 %191
        %195 = vset.pattern.permute.xlu0 0
        %196 = vperm.xlu0 %195, %v142
        %v197 = vpop.permute.xlu0 %196
        %v199 = vlaneseq
        %v200 = vshrl.u32 %v199, 7
        %v201 = vsub.s32 0, %v200
        %v202 = vrot.slane %v187, %v201
        %v203 = vmul.f32 %v192, %v202
        %v204 = vmul.f32 %v197, %v202
        %205 = vset.pattern.permute.xlu0 10
        %206 = vperm.xlu0 %205, %v141
        %v207 = vpop.permute.xlu0 %206
        %209 = vset.pattern.permute.xlu0 10
        %210 = vperm.xlu0 %209, %v142
        %v211 = vpop.permute.xlu0 %210
        %v213 = vadd.f32 %v207, %v203
        %v214 = vadd.f32 %v211, %v204
        %215 = vset.pattern.permute.xlu0 1
        %216 = vperm.xlu0 %215, %v141
        %v217 = vpop.permute.xlu0 %216
        %219 = vset.pattern.permute.xlu0 1
        %220 = vperm.xlu0 %219, %v142
        %v221 = vpop.permute.xlu0 %220
        %v223 = vlaneseq
        %v224 = vshrl.u32 %v223, 7
        %v225 = vsub.s32 1, %v224
        %v226 = vrot.slane %v187, %v225
        %v227 = vmul.f32 %v217, %v226
        %v228 = vmul.f32 %v221, %v226
        %v229 = vadd.f32 %v213, %v227
        %v230 = vadd.f32 %v214, %v228
        %231 = vset.pattern.permute.xlu0 2
        %232 = vperm.xlu0 %231, %v141
        %v233 = vpop.permute.xlu0 %232
        %235 = vset.pattern.permute.xlu0 2
        %236 = vperm.xlu0 %235, %v142
        %v237 = vpop.permute.xlu0 %236
        %v239 = vlaneseq
        %v240 = vshrl.u32 %v239, 7
        %v241 = vsub.s32 2, %v240
        %v242 = vrot.slane %v187, %v241
        %v243 = vmul.f32 %v233, %v242
        %v244 = vmul.f32 %v237, %v242
        %v245 = vadd.f32 %v229, %v243
        %v246 = vadd.f32 %v230, %v244
        %247 = vset.pattern.permute.xlu0 3
        %248 = vperm.xlu0 %247, %v141
        %v249 = vpop.permute.xlu0 %248
        %251 = vset.pattern.permute.xlu0 3
        %252 = vperm.xlu0 %251, %v142
        %v253 = vpop.permute.xlu0 %252
        %v255 = vlaneseq
        %v256 = vshrl.u32 %v255, 7
        %v257 = vsub.s32 3, %v256
        %v258 = vrot.slane %v187, %v257
        %v259 = vmul.f32 %v249, %v258
        %v260 = vmul.f32 %v253, %v258
        %v261 = vadd.f32 %v245, %v259
        %v262 = vadd.f32 %v246, %v260
        %263 = vset.pattern.permute.xlu0 4
        %264 = vperm.xlu0 %263, %v141
        %v265 = vpop.permute.xlu0 %264
        %267 = vset.pattern.permute.xlu0 4
        %268 = vperm.xlu0 %267, %v142
        %v269 = vpop.permute.xlu0 %268
        %v271 = vlaneseq
        %v272 = vshrl.u32 %v271, 7
        %v273 = vsub.s32 4, %v272
        %v274 = vrot.slane %v187, %v273
        %v275 = vmul.f32 %v265, %v274
        %v276 = vmul.f32 %v269, %v274
        %v277 = vadd.f32 %v261, %v275
        %v278 = vadd.f32 %v262, %v276
        %279 = vset.pattern.permute.xlu0 5
        %280 = vperm.xlu0 %279, %v141
        %v281 = vpop.permute.xlu0 %280
        %283 = vset.pattern.permute.xlu0 5
        %284 = vperm.xlu0 %283, %v142
        %v285 = vpop.permute.xlu0 %284
        %v287 = vlaneseq
        %v288 = vshrl.u32 %v287, 7
        %v289 = vsub.s32 5, %v288
        %v290 = vrot.slane %v187, %v289
        %v291 = vmul.f32 %v281, %v290
        %v292 = vmul.f32 %v285, %v290
        %v293 = vadd.f32 %v277, %v291
        %v294 = vadd.f32 %v278, %v292
        %295 = vset.pattern.permute.xlu0 6
        %296 = vperm.xlu0 %295, %v141
        %v297 = vpop.permute.xlu0 %296
        %299 = vset.pattern.permute.xlu0 6
        %300 = vperm.xlu0 %299, %v142
        %v301 = vpop.permute.xlu0 %300
        %v303 = vlaneseq
        %v304 = vshrl.u32 %v303, 7
        %v305 = vsub.s32 6, %v304
        %v306 = vrot.slane %v187, %v305
        %v307 = vmul.f32 %v297, %v306
        %v308 = vmul.f32 %v301, %v306
        %v309 = vadd.f32 %v293, %v307
        %v310 = vadd.f32 %v294, %v308
        %311 = vset.pattern.permute.xlu0 7
        %312 = vperm.xlu0 %311, %v141
        %v313 = vpop.permute.xlu0 %312
        %315 = vset.pattern.permute.xlu0 7
        %316 = vperm.xlu0 %315, %v142
        %v317 = vpop.permute.xlu0 %316
        %v319 = vlaneseq
        %v320 = vshrl.u32 %v319, 7
        %v321 = vsub.s32 7, %v320
        %v322 = vrot.slane %v187, %v321
        %v323 = vmul.f32 %v313, %v322
        %v324 = vmul.f32 %v317, %v322
        %v325 = vadd.f32 %v309, %v323
        %v326 = vadd.f32 %v310, %v324
        %327 = vset.pattern.permute.xlu0 8
        %328 = vperm.xlu0 %327, %v141
        %v329 = vpop.permute.xlu0 %328
        %331 = vset.pattern.permute.xlu0 8
        %332 = vperm.xlu0 %331, %v142
        %v333 = vpop.permute.xlu0 %332
        %v335 = vlaneseq
        %v336 = vshrl.u32 %v335, 7
        %v337 = vsub.s32 0, %v336
        %v338 = vrot.slane %v188, %v337
        %v339 = vmul.f32 %v329, %v338
        %v340 = vmul.f32 %v333, %v338
        %v341 = vadd.f32 %v325, %v339
        %v342 = vadd.f32 %v326, %v340
        %343 = vset.pattern.permute.xlu0 9
        %344 = vperm.xlu0 %343, %v141
        %v345 = vpop.permute.xlu0 %344
        %347 = vset.pattern.permute.xlu0 9
        %348 = vperm.xlu0 %347, %v142
        %v349 = vpop.permute.xlu0 %348
        %v351 = vlaneseq
        %v352 = vshrl.u32 %v351, 7
        %v353 = vsub.s32 1, %v352
        %v354 = vrot.slane %v188, %v353
        %v355 = vmul.f32 %v345, %v354
        %v356 = vmul.f32 %v349, %v354
        %v357 = vadd.f32 %v341, %v355
        %v358 = vadd.f32 %v342, %v356
        %v359 = vmax.f32 %v357, 0.0
        %v360 = vmax.f32 %v358, 0.0
        %362 = vset.pattern.permute.xlu0 0
        %363 = vperm.xlu0 %362, %v143
        %v364 = vpop.permute.xlu0 %363
        %367 = vset.pattern.permute.xlu0 0
        %368 = vperm.xlu0 %367, %v144
        %v369 = vpop.permute.xlu0 %368
        %v371 = vlaneseq
        %v372 = vshrl.u32 %v371, 7
        %v373 = vsub.s32 0, %v372
        %v374 = vrot.slane %v359, %v373
        %v375 = vmul.f32 %v364, %v374
        %v376 = vmul.f32 %v369, %v374
        %377 = vset.pattern.permute.xlu0 10
        %378 = vperm.xlu0 %377, %v143
        %v379 = vpop.permute.xlu0 %378
        %381 = vset.pattern.permute.xlu0 10
        %382 = vperm.xlu0 %381, %v144
        %v383 = vpop.permute.xlu0 %382
        %v385 = vadd.f32 %v379, %v375
        %v386 = vadd.f32 %v383, %v376
        %387 = vset.pattern.permute.xlu0 1
        %388 = vperm.xlu0 %387, %v143
        %v389 = vpop.permute.xlu0 %388
        %391 = vset.pattern.permute.xlu0 1
        %392 = vperm.xlu0 %391, %v144
        %v393 = vpop.permute.xlu0 %392
        %v395 = vlaneseq
        %v396 = vshrl.u32 %v395, 7
        %v397 = vsub.s32 1, %v396
        %v398 = vrot.slane %v359, %v397
        %v399 = vmul.f32 %v389, %v398
        %v400 = vmul.f32 %v393, %v398
        %v401 = vadd.f32 %v385, %v399
        %v402 = vadd.f32 %v386, %v400
        %403 = vset.pattern.permute.xlu0 2
        %404 = vperm.xlu0 %403, %v143
        %v405 = vpop.permute.xlu0 %404
        %407 = vset.pattern.permute.xlu0 2
        %408 = vperm.xlu0 %407, %v144
        %v409 = vpop.permute.xlu0 %408
        %v411 = vlaneseq
        %v412 = vshrl.u32 %v411, 7
        %v413 = vsub.s32 2, %v412
        %v414 = vrot.slane %v359, %v413
        %v415 = vmul.f32 %v405, %v414
        %v416 = vmul.f32 %v409, %v414
        %v417 = vadd.f32 %v401, %v415
        %v418 = vadd.f32 %v402, %v416
        %419 = vset.pattern.permute.xlu0 3
        %420 = vperm.xlu0 %419, %v143
        %v421 = vpop.permute.xlu0 %420
        %423 = vset.pattern.permute.xlu0 3
        %424 = vperm.xlu0 %423, %v144
        %v425 = vpop.permute.xlu0 %424
        %v427 = vlaneseq
        %v428 = vshrl.u32 %v427, 7
        %v429 = vsub.s32 3, %v428
        %v430 = vrot.slane %v359, %v429
        %v431 = vmul.f32 %v421, %v430
        %v432 = vmul.f32 %v425, %v430
        %v433 = vadd.f32 %v417, %v431
        %v434 = vadd.f32 %v418, %v432
        %435 = vset.pattern.permute.xlu0 4
        %436 = vperm.xlu0 %435, %v143
        %v437 = vpop.permute.xlu0 %436
        %439 = vset.pattern.permute.xlu0 4
        %440 = vperm.xlu0 %439, %v144
        %v441 = vpop.permute.xlu0 %440
        %v443 = vlaneseq
        %v444 = vshrl.u32 %v443, 7
        %v445 = vsub.s32 4, %v444
        %v446 = vrot.slane %v359, %v445
        %v447 = vmul.f32 %v437, %v446
        %v448 = vmul.f32 %v441, %v446
        %v449 = vadd.f32 %v433, %v447
        %v450 = vadd.f32 %v434, %v448
        %451 = vset.pattern.permute.xlu0 5
        %452 = vperm.xlu0 %451, %v143
        %v453 = vpop.permute.xlu0 %452
        %455 = vset.pattern.permute.xlu0 5
        %456 = vperm.xlu0 %455, %v144
        %v457 = vpop.permute.xlu0 %456
        %v459 = vlaneseq
        %v460 = vshrl.u32 %v459, 7
        %v461 = vsub.s32 5, %v460
        %v462 = vrot.slane %v359, %v461
        %v463 = vmul.f32 %v453, %v462
        %v464 = vmul.f32 %v457, %v462
        %v465 = vadd.f32 %v449, %v463
        %v466 = vadd.f32 %v450, %v464
        %467 = vset.pattern.permute.xlu0 6
        %468 = vperm.xlu0 %467, %v143
        %v469 = vpop.permute.xlu0 %468
        %471 = vset.pattern.permute.xlu0 6
        %472 = vperm.xlu0 %471, %v144
        %v473 = vpop.permute.xlu0 %472
        %v475 = vlaneseq
        %v476 = vshrl.u32 %v475, 7
        %v477 = vsub.s32 6, %v476
        %v478 = vrot.slane %v359, %v477
        %v479 = vmul.f32 %v469, %v478
        %v480 = vmul.f32 %v473, %v478
        %v481 = vadd.f32 %v465, %v479
        %v482 = vadd.f32 %v466, %v480
        %483 = vset.pattern.permute.xlu0 7
        %484 = vperm.xlu0 %483, %v143
        %v485 = vpop.permute.xlu0 %484
        %487 = vset.pattern.permute.xlu0 7
        %488 = vperm.xlu0 %487, %v144
        %v489 = vpop.permute.xlu0 %488
        %v491 = vlaneseq
        %v492 = vshrl.u32 %v491, 7
        %v493 = vsub.s32 7, %v492
        %v494 = vrot.slane %v359, %v493
        %v495 = vmul.f32 %v485, %v494
        %v496 = vmul.f32 %v489, %v494
        %v497 = vadd.f32 %v481, %v495
        %v498 = vadd.f32 %v482, %v496
        %499 = vset.pattern.permute.xlu0 8
        %500 = vperm.xlu0 %499, %v143
        %v501 = vpop.permute.xlu0 %500
        %503 = vset.pattern.permute.xlu0 8
        %504 = vperm.xlu0 %503, %v144
        %v505 = vpop.permute.xlu0 %504
        %v507 = vlaneseq
        %v508 = vshrl.u32 %v507, 7
        %v509 = vsub.s32 0, %v508
        %v510 = vrot.slane %v360, %v509
        %v511 = vmul.f32 %v501, %v510
        %v512 = vmul.f32 %v505, %v510
        %v513 = vadd.f32 %v497, %v511
        %v514 = vadd.f32 %v498, %v512
        %515 = vset.pattern.permute.xlu0 9
        %516 = vperm.xlu0 %515, %v143
        %v517 = vpop.permute.xlu0 %516
        %519 = vset.pattern.permute.xlu0 9
        %520 = vperm.xlu0 %519, %v144
        %v521 = vpop.permute.xlu0 %520
        %v523 = vlaneseq
        %v524 = vshrl.u32 %v523, 7
        %v525 = vsub.s32 1, %v524
        %v526 = vrot.slane %v360, %v525
        %v527 = vmul.f32 %v517, %v526
        %v528 = vmul.f32 %v521, %v526
        %v529 = vadd.f32 %v513, %v527
        %v530 = vadd.f32 %v514, %v528
        %v531 = vmax.f32 %v529, 0.0
        %v532 = vmax.f32 %v530, 0.0
        %533 = vset.pattern.permute.xlu0 3
        %534 = vperm.xlu0 %533, %v139
        %v535 = vpop.permute.xlu0 %534
        %537 = vset.pattern.permute.xlu0 3
        %538 = vperm.xlu0 %537, %v140
        %v539 = vpop.permute.xlu0 %538
        %v541 = vmul.f32 %v535, %v531
        %v542 = vmul.f32 %v539, %v532
        %v543 = vadd.f32 %v541, %v542
        %v544 = vrot.slane %v543, 4
        %v545 = vadd.f32 %v543, %v544
        %v546 = vrot.slane %v545, 2
        %v547 = vadd.f32 %v545, %v546
        %v548 = vrot.slane %v547, 1
        %v549 = vadd.f32 %v547, %v548
        %550 = vset.pattern.permute.xlu0 4
        %551 = vperm.xlu0 %550, %v139
        %v552 = vpop.permute.xlu0 %551
        %v554 = vadd.f32 %v549, %v552
        %555 = vst [vmem:[%s133] sm:$0x1] %v554
        %s556 = sand.u32 %s71, 1
        %s557 = scalar_lea.sflag [#allocation3], %s556
        %s558 = sand.u32 %s71, 1
        %s559 = scalar_lea.vmem [#allocation2], %s558
        // Predicated region
        $region29: #{tpu_custom_call.1} parent=27 // pred_check
          %p560 = pneg %p81
        $region30: #{tpu_custom_call.1} parent=27 // pred_check_branch
          %562 = sbr.rel (%p560) target = $region32
        $region31: #{tpu_custom_call.1} parent=27 // pred_region
          %s564 = ssub.s32 16, 16
          %565 = vsyncadd %s557, %s564
          %s566 = smul.addr %s16, 16
          %s567 = scalar_lea.hbm %s2, %s566
          %s569 = sshll.u32 %s559, 4
          %s570 = int_to_ptr.vmem [resolvable:$true] %s569
          %572 = dma.vmem_to_hbm [thread:$0]  %s570, 16, %s567, %s557
        $region32: #{tpu_custom_call.1} parent=27 // pred_fallthru
          _
      $region28: #{tpu_custom_call.1} parent=5 // pred_fallthru
        _
      %p573 = scmp.le.s32.totalorder 2, %s11
      // Predicated region
      $region33: #{tpu_custom_call.1} parent=5 // pred_check
        %p574 = pneg %p573
      $region34: #{tpu_custom_call.1} parent=5 // pred_check_branch
        %576 = sbr.rel (%p574) target = $region36
      $region35: #{tpu_custom_call.1} parent=5 // pred_region
        %s577 = ssub.s32 %s11, 2
        // Predicated region
        $region37: #{tpu_custom_call.1} parent=35 // pred_check
          %p578 = pneg %p87
        $region38: #{tpu_custom_call.1} parent=35 // pred_check_branch
          %580 = sbr.rel (%p578) target = $region40
        $region39: #{tpu_custom_call.1} parent=35 // pred_region
          %s581 = sand.u32 %s72, 1
          %s582 = scalar_lea.sflag [#allocation3], %s581
          %s583 = sand.u32 %s72, 1
          %s584 = scalar_lea.vmem [#allocation2], %s583
          %585 = dma.done %s582, 16
        $region40: #{tpu_custom_call.1} parent=35 // pred_fallthru
          _
      $region36: #{tpu_custom_call.1} parent=5 // pred_fallthru
        _
    $region6: #{tpu_custom_call.1} parent=1 // loop_footer
      %s15 = sadd.s32 1, %s11
    $region7: #{tpu_custom_call.1} parent=1 // loop_footer_branch
      %10 = sbr.rel target = $region3
    $region8: #{tpu_custom_call.1} parent=1 // loop_exit
      _
    %586 = vsyncpa [#allocation3], 1
    %s587 = scalar_lea.sflag [#allocation3], 1
    %588 = vsyncpa %s587, 1

</llo_original>
